<compile_context>
chip_gen: v6e
topology: v6e:2x2x1
jax: 0.10.0
libtpu: 0.0.40
codegen_flags: <defaults>
</compile_context>

<pallas_src>
import functools

import jax
import jax.numpy as jnp
import numpy as np
from jax.experimental import pallas as pl
from jax.experimental.pallas import tpu as pltpu


# ---------------------------------------------------------------------------
# Elementwise helpers (VPU/EUP only; no cross-lane traffic).
# ---------------------------------------------------------------------------
_INV_SQRT2 = 0.7071067811865476


def _erf(x):
    # Abramowitz & Stegun 7.1.26, |err| <= 1.5e-7.  The 1/(1+p*|x|) divide is
    # routed to the EUP slot via pl.reciprocal(approx=True); exp() is EUP too,
    # so the VALU only sees the short Horner chain.
    t = pl.reciprocal(1.0 + 0.3275911 * jnp.abs(x), approx=True)
    poly = ((((1.061405429 * t - 1.453152027) * t + 1.421413741) * t
             - 0.284496736) * t + 0.254829592) * t
    e = 1.0 - poly * jnp.exp(-(x * x))
    return jnp.where(x >= 0, e, -e)


def _gelu_exact(x):
    # F.gelu default (erf-based, NOT the tanh approximation).
    return 0.5 * x * (1.0 + _erf(x * _INV_SQRT2))


def _round_up(x, m):
    return ((x + m - 1) // m) * m


# ---------------------------------------------------------------------------
# Pallas kernel: fused MLP over a lane-dense tile of rows (transposed layout),
# strip-mined over lane chunks so intermediates stay in vregs.
# ---------------------------------------------------------------------------
def _mlp_kernel(*refs, n_layers, n_chunks, chunk, periodic):
    if periodic:
        scale_ref, refs = refs[0], refs[1:]   # (1,1) scalar in SMEM
    xT_ref = refs[0]          # (d_in, TILE)   rows on lanes
    oT_ref = refs[-1]         # (d_out, TILE)
    wb = refs[1:-1]           # alternating (W_T [out,in], b [out,1]) refs

    for c in range(n_chunks):                 # static offsets -> free slicing
        col = c * chunk
        h = xT_ref[:, pl.ds(col, chunk)]      # (d_in, chunk) f32
        if periodic:
            h = jnp.sin(scale_ref[0, 0] * h)  # fused periodic embedding (EUP)
        for i in range(n_layers):
            w = wb[2 * i][...]                # (d_out_i, d_in_i) VMEM-resident
            b = wb[2 * i + 1][...]            # (d_out_i, 1) broadcast on lanes
            h = jnp.dot(w, h, preferred_element_type=jnp.float32) + b
            if i < n_layers - 1:
                h = _gelu_exact(h)
        oT_ref[:, pl.ds(col, chunk)] = h.astype(oT_ref.dtype)


# ---------------------------------------------------------------------------
# Wrapper
# ---------------------------------------------------------------------------
def mlp_kernel_forward(x, params, *, tile_rows=1024, chunk_cols=256,
                       periodic_embedding=False, core_parallel=False):
    """x: [..., in_features]; params: list of (W[in,out], b[1,out])."""
    lead_shape = x.shape[:-1]
    din = x.shape[-1]
    x2d = x.reshape(-1, din).astype(jnp.float32)
    n_rows = x2d.shape[0]

    n_layers = len(params)
    dout = params[-1][0].shape[1]

    operands = []
    in_specs = []

    if periodic_embedding:
        # Matches torch: x_max = max(x); x = sin(2*pi/x_max * x).  Only the
        # scalar goes through SMEM; the sin is applied in-kernel (no extra
        # read+write HBM pass over x).
        scale = (2.0 * jnp.pi / jnp.max(x2d)).reshape(1, 1).astype(jnp.float32)
        operands.append(scale)
        in_specs.append(pl.BlockSpec(memory_space=pltpu.MemorySpace.SMEM))

    # Rows on the lane axis: a single transpose copy (no pad / no slice —
    # partial boundary blocks handle arbitrary N).
    xT = x2d.T                                     # (din, n_rows)

    # Row tile: as large as the cap (DMA efficiency), multiple of the chunk so
    # the in-kernel strip-mining loop has a static trip count.  Intermediates
    # per chunk are (hidden, chunk) f32 -> a handful of vregs.
    chunk = max(128, _round_up(chunk_cols, 128))
    tile = min(_round_up(tile_rows, chunk), _round_up(n_rows, chunk))
    n_chunks = tile // chunk
    grid = (pl.cdiv(n_rows, tile),)

    in_specs.append(pl.BlockSpec((din, tile), lambda i: (0, i)))
    operands.append(xT)

    for (w, b) in params:
        wT = jnp.asarray(w, jnp.float32).T         # (out, in): y_T = W_T @ x_T
        bT = jnp.asarray(b, jnp.float32).reshape(-1, 1)
        in_specs.append(pl.BlockSpec(wT.shape, lambda i: (0, 0)))  # resident
        in_specs.append(pl.BlockSpec(bT.shape, lambda i: (0, 0)))  # resident
        operands.extend([wT, bT])

    out_spec = pl.BlockSpec((dout, tile), lambda i: (0, i))

    # Plain "parallel" does not shard the grid across TensorCores; on v7x
    # request real dual-core codegen explicitly via core_parallel=True.
    dim_sem = (pltpu.CORE_PARALLEL,) if core_parallel else ("parallel",)

    kernel = functools.partial(_mlp_kernel, n_layers=n_layers,
                               n_chunks=n_chunks, chunk=chunk,
                               periodic=periodic_embedding)
    yT = pl.pallas_call(
        kernel,
        out_shape=jax.ShapeDtypeStruct((dout, n_rows), jnp.float32),
        grid=grid,
        in_specs=in_specs,
        out_specs=out_spec,
        compiler_params=pltpu.CompilerParams(dimension_semantics=dim_sem),
    )(*operands)

    # One small transpose back to the module's [..., out_features] layout; a
    # fused downstream consumer could take the [dout, N] slab directly.
    return yT.T.reshape(*lead_shape, dout)


# TODO(synk): FiLM path (film_type != 'disabled') not implemented — the FiLM
# module definition is not part of the provided reference code.


# ---------------------------------------------------------------------------
# Deterministic parameter construction (torch.nn.Linear-style uniform init).
# ---------------------------------------------------------------------------
def init_mlp_params(key, in_features, hidden_features, hidden_layers, out_features):
    dims = [in_features] + [hidden_features] * (hidden_layers + 1) + [out_features]
    params = []
    for i in range(len(dims) - 1):
        fan_in, fan_out = dims[i], dims[i + 1]
        bound = 1.0 / np.sqrt(fan_in)
        key, kw, kb = jax.random.split(key, 3)
        w = jax.random.uniform(kw, (fan_in, fan_out), jnp.float32, -bound, bound)
        b = jax.random.uniform(kb, (1, fan_out), jnp.float32, -bound, bound)
        params.append((w, b))
    return params


def _reference_forward(x, params, periodic_embedding=False):
    h = x.astype(jnp.float32)
    if periodic_embedding:
        h = jnp.sin(2.0 * jnp.pi / jnp.max(h) * h)
    h = h.reshape(-1, h.shape[-1])
    n = len(params)
    for i, (w, b) in enumerate(params):
        h = h @ w + b
        if i < n - 1:
            h = jax.nn.gelu(h, approximate=False)
    return h.reshape(*x.shape[:-1], params[-1][0].shape[1])


if __name__ == "__main__":
    # Coord-MLP config consistent with the module:
    # in_features=3, hidden_features=32, hidden_layers=2, out_features=4.
    in_features, hidden_features, hidden_layers, out_features = 3, 32, 2, 4

    key = jax.random.PRNGKey(0)
    kx1, kx2, kp = jax.random.split(key, 3)
    params = init_mlp_params(kp, in_features, hidden_features, hidden_layers,
                             out_features)

    # Case 1: 2x100 points -> single (partial) row block, single chunk.
    x1 = jax.random.normal(kx1, (2, 100, in_features), dtype=jnp.float32)
    y1 = jax.block_until_ready(mlp_kernel_forward(x1, params))
    np.testing.assert_allclose(np.asarray(y1),
                               np.asarray(_reference_forward(x1, params)),
                               atol=2e-3, rtol=2e-3)

    # Case 2: 2x1500 points with periodic embedding -> multi-step grid,
    # multi-chunk inner loop, partial boundary block, fused sin.
    x2 = jax.random.normal(kx2, (2, 1500, in_features), dtype=jnp.float32)
    y2 = jax.block_until_ready(
        mlp_kernel_forward(x2, params, periodic_embedding=True))
    y2_ref = _reference_forward(x2, params, periodic_embedding=True)
    np.testing.assert_allclose(np.asarray(y2), np.asarray(y2_ref),
                               atol=2e-3, rtol=2e-3)

    print("KERNEL_OK")
</pallas_src>

<mosaic_0001>
module attributes {stable_mosaic.version = 11 : i64} {
  func.func @_mlp_kernel(%arg0: i32, %arg1: memref<3x256xf32, #tpu.memory_space<vmem>>, %arg2: memref<32x3xf32, #tpu.memory_space<vmem>>, %arg3: memref<32x1xf32, #tpu.memory_space<vmem>>, %arg4: memref<32x32xf32, #tpu.memory_space<vmem>>, %arg5: memref<32x1xf32, #tpu.memory_space<vmem>>, %arg6: memref<32x32xf32, #tpu.memory_space<vmem>>, %arg7: memref<32x1xf32, #tpu.memory_space<vmem>>, %arg8: memref<4x32xf32, #tpu.memory_space<vmem>>, %arg9: memref<4x1xf32, #tpu.memory_space<vmem>>, %arg10: memref<4x256xf32, #tpu.memory_space<vmem>>) attributes {dimension_semantics = [#tpu.dimension_semantics<parallel>], iteration_bounds = array<i64: 1>, scalar_prefetch = 0 : i64, scratch_operands = 0 : i64, tpu.core_type = #tpu.core_type<tc>, window_params = [{transform_indices = @transform_0, window_bounds = array<i64: 3, 256>}, {pipeline_mode = #tpu.pipeline_mode<synchronous>, transform_indices = @transform_1, window_bounds = array<i64: 32, 3>}, {pipeline_mode = #tpu.pipeline_mode<synchronous>, transform_indices = @transform_2, window_bounds = array<i64: 32, 1>}, {pipeline_mode = #tpu.pipeline_mode<synchronous>, transform_indices = @transform_3, window_bounds = array<i64: 32, 32>}, {pipeline_mode = #tpu.pipeline_mode<synchronous>, transform_indices = @transform_4, window_bounds = array<i64: 32, 1>}, {pipeline_mode = #tpu.pipeline_mode<synchronous>, transform_indices = @transform_5, window_bounds = array<i64: 32, 32>}, {pipeline_mode = #tpu.pipeline_mode<synchronous>, transform_indices = @transform_6, window_bounds = array<i64: 32, 1>}, {pipeline_mode = #tpu.pipeline_mode<synchronous>, transform_indices = @transform_7, window_bounds = array<i64: 4, 32>}, {pipeline_mode = #tpu.pipeline_mode<synchronous>, transform_indices = @transform_8, window_bounds = array<i64: 4, 1>}, {transform_indices = @transform_9, window_bounds = array<i64: 4, 256>}]} {
    %c0 = arith.constant 0 : index
    %c0_0 = arith.constant 0 : index
    %0 = vector.load %arg1[%c0, %c0_0] : memref<3x256xf32, #tpu.memory_space<vmem>>, vector<3x256xf32>
    %c0_1 = arith.constant 0 : index
    %c0_2 = arith.constant 0 : index
    %1 = vector.load %arg2[%c0_1, %c0_2] : memref<32x3xf32, #tpu.memory_space<vmem>>, vector<32x3xf32>
    %c0_3 = arith.constant 0 : index
    %c0_4 = arith.constant 0 : index
    %2 = vector.load %arg3[%c0_3, %c0_4] : memref<32x1xf32, #tpu.memory_space<vmem>>, vector<32x1xf32>
    %cst = arith.constant dense<0.000000e+00> : vector<32x256xf32>
    %3 = tpu.matmul %1, %0, %cst {dimension_numbers = #tpu.dot_dimension_numbers<[1], [0], [0], [1], [0, 0, 1, 1], [], []>} : vector<32x3xf32>, vector<3x256xf32>, vector<32x256xf32> -> vector<32x256xf32>
    %4 = vector.broadcast %2 : vector<32x1xf32> to vector<32x256xf32>
    %5 = arith.addf %3, %4 : vector<32x256xf32>
    %cst_5 = arith.constant 5.000000e-01 : f32
    %6 = vector.broadcast %cst_5 : f32 to vector<32x256xf32>
    %7 = arith.mulf %6, %5 : vector<32x256xf32>
    %cst_6 = arith.constant 0.707106769 : f32
    %8 = vector.broadcast %cst_6 : f32 to vector<32x256xf32>
    %9 = arith.mulf %5, %8 : vector<32x256xf32>
    %10 = math.absf %9 : vector<32x256xf32>
    %cst_7 = arith.constant 0.327591091 : f32
    %11 = vector.broadcast %cst_7 : f32 to vector<32x256xf32>
    %12 = arith.mulf %11, %10 : vector<32x256xf32>
    %cst_8 = arith.constant 1.000000e+00 : f32
    %13 = vector.broadcast %cst_8 : f32 to vector<32x256xf32>
    %14 = arith.addf %13, %12 : vector<32x256xf32>
    %15 = tpu.reciprocal %14 {approx = true} : vector<32x256xf32> -> vector<32x256xf32>
    %cst_9 = arith.constant 1.06140542 : f32
    %16 = vector.broadcast %cst_9 : f32 to vector<32x256xf32>
    %17 = arith.mulf %16, %15 : vector<32x256xf32>
    %cst_10 = arith.constant 1.45315206 : f32
    %18 = vector.broadcast %cst_10 : f32 to vector<32x256xf32>
    %19 = arith.subf %17, %18 : vector<32x256xf32>
    %20 = arith.mulf %19, %15 : vector<32x256xf32>
    %cst_11 = arith.constant 1.42141378 : f32
    %21 = vector.broadcast %cst_11 : f32 to vector<32x256xf32>
    %22 = arith.addf %20, %21 : vector<32x256xf32>
    %23 = arith.mulf %22, %15 : vector<32x256xf32>
    %cst_12 = arith.constant 0.284496725 : f32
    %24 = vector.broadcast %cst_12 : f32 to vector<32x256xf32>
    %25 = arith.subf %23, %24 : vector<32x256xf32>
    %26 = arith.mulf %25, %15 : vector<32x256xf32>
    %cst_13 = arith.constant 0.254829586 : f32
    %27 = vector.broadcast %cst_13 : f32 to vector<32x256xf32>
    %28 = arith.addf %26, %27 : vector<32x256xf32>
    %29 = arith.mulf %28, %15 : vector<32x256xf32>
    %30 = arith.mulf %9, %9 : vector<32x256xf32>
    %cst_14 = arith.constant 0.000000e+00 : f32
    %31 = vector.broadcast %cst_14 : f32 to vector<32x256xf32>
    %32 = arith.subf %31, %30 : vector<32x256xf32>
    %33 = math.exp %32 : vector<32x256xf32>
    %34 = arith.mulf %29, %33 : vector<32x256xf32>
    %cst_15 = arith.constant 1.000000e+00 : f32
    %35 = vector.broadcast %cst_15 : f32 to vector<32x256xf32>
    %36 = arith.subf %35, %34 : vector<32x256xf32>
    %cst_16 = arith.constant 0.000000e+00 : f32
    %37 = vector.broadcast %cst_16 : f32 to vector<32x256xf32>
    %38 = arith.cmpf oge, %9, %37 : vector<32x256xf32>
    %cst_17 = arith.constant 0.000000e+00 : f32
    %39 = vector.broadcast %cst_17 : f32 to vector<32x256xf32>
    %40 = arith.subf %39, %36 : vector<32x256xf32>
    %41 = arith.select %38, %36, %40 : vector<32x256xi1>, vector<32x256xf32>
    %cst_18 = arith.constant 1.000000e+00 : f32
    %42 = vector.broadcast %cst_18 : f32 to vector<32x256xf32>
    %43 = arith.addf %42, %41 : vector<32x256xf32>
    %44 = arith.mulf %7, %43 : vector<32x256xf32>
    %c0_19 = arith.constant 0 : index
    %c0_20 = arith.constant 0 : index
    %45 = vector.load %arg4[%c0_19, %c0_20] : memref<32x32xf32, #tpu.memory_space<vmem>>, vector<32x32xf32>
    %c0_21 = arith.constant 0 : index
    %c0_22 = arith.constant 0 : index
    %46 = vector.load %arg5[%c0_21, %c0_22] : memref<32x1xf32, #tpu.memory_space<vmem>>, vector<32x1xf32>
    %cst_23 = arith.constant dense<0.000000e+00> : vector<32x256xf32>
    %47 = tpu.matmul %45, %44, %cst_23 {dimension_numbers = #tpu.dot_dimension_numbers<[1], [0], [0], [1], [0, 0, 1, 1], [], []>} : vector<32x32xf32>, vector<32x256xf32>, vector<32x256xf32> -> vector<32x256xf32>
    %48 = vector.broadcast %46 : vector<32x1xf32> to vector<32x256xf32>
    %49 = arith.addf %47, %48 : vector<32x256xf32>
    %cst_24 = arith.constant 5.000000e-01 : f32
    %50 = vector.broadcast %cst_24 : f32 to vector<32x256xf32>
    %51 = arith.mulf %50, %49 : vector<32x256xf32>
    %cst_25 = arith.constant 0.707106769 : f32
    %52 = vector.broadcast %cst_25 : f32 to vector<32x256xf32>
    %53 = arith.mulf %49, %52 : vector<32x256xf32>
    %54 = math.absf %53 : vector<32x256xf32>
    %cst_26 = arith.constant 0.327591091 : f32
    %55 = vector.broadcast %cst_26 : f32 to vector<32x256xf32>
    %56 = arith.mulf %55, %54 : vector<32x256xf32>
    %cst_27 = arith.constant 1.000000e+00 : f32
    %57 = vector.broadcast %cst_27 : f32 to vector<32x256xf32>
    %58 = arith.addf %57, %56 : vector<32x256xf32>
    %59 = tpu.reciprocal %58 {approx = true} : vector<32x256xf32> -> vector<32x256xf32>
    %cst_28 = arith.constant 1.06140542 : f32
    %60 = vector.broadcast %cst_28 : f32 to vector<32x256xf32>
    %61 = arith.mulf %60, %59 : vector<32x256xf32>
    %cst_29 = arith.constant 1.45315206 : f32
    %62 = vector.broadcast %cst_29 : f32 to vector<32x256xf32>
    %63 = arith.subf %61, %62 : vector<32x256xf32>
    %64 = arith.mulf %63, %59 : vector<32x256xf32>
    %cst_30 = arith.constant 1.42141378 : f32
    %65 = vector.broadcast %cst_30 : f32 to vector<32x256xf32>
    %66 = arith.addf %64, %65 : vector<32x256xf32>
    %67 = arith.mulf %66, %59 : vector<32x256xf32>
    %cst_31 = arith.constant 0.284496725 : f32
    %68 = vector.broadcast %cst_31 : f32 to vector<32x256xf32>
    %69 = arith.subf %67, %68 : vector<32x256xf32>
    %70 = arith.mulf %69, %59 : vector<32x256xf32>
    %cst_32 = arith.constant 0.254829586 : f32
    %71 = vector.broadcast %cst_32 : f32 to vector<32x256xf32>
    %72 = arith.addf %70, %71 : vector<32x256xf32>
    %73 = arith.mulf %72, %59 : vector<32x256xf32>
    %74 = arith.mulf %53, %53 : vector<32x256xf32>
    %cst_33 = arith.constant 0.000000e+00 : f32
    %75 = vector.broadcast %cst_33 : f32 to vector<32x256xf32>
    %76 = arith.subf %75, %74 : vector<32x256xf32>
    %77 = math.exp %76 : vector<32x256xf32>
    %78 = arith.mulf %73, %77 : vector<32x256xf32>
    %cst_34 = arith.constant 1.000000e+00 : f32
    %79 = vector.broadcast %cst_34 : f32 to vector<32x256xf32>
    %80 = arith.subf %79, %78 : vector<32x256xf32>
    %cst_35 = arith.constant 0.000000e+00 : f32
    %81 = vector.broadcast %cst_35 : f32 to vector<32x256xf32>
    %82 = arith.cmpf oge, %53, %81 : vector<32x256xf32>
    %cst_36 = arith.constant 0.000000e+00 : f32
    %83 = vector.broadcast %cst_36 : f32 to vector<32x256xf32>
    %84 = arith.subf %83, %80 : vector<32x256xf32>
    %85 = arith.select %82, %80, %84 : vector<32x256xi1>, vector<32x256xf32>
    %cst_37 = arith.constant 1.000000e+00 : f32
    %86 = vector.broadcast %cst_37 : f32 to vector<32x256xf32>
    %87 = arith.addf %86, %85 : vector<32x256xf32>
    %88 = arith.mulf %51, %87 : vector<32x256xf32>
    %c0_38 = arith.constant 0 : index
    %c0_39 = arith.constant 0 : index
    %89 = vector.load %arg6[%c0_38, %c0_39] : memref<32x32xf32, #tpu.memory_space<vmem>>, vector<32x32xf32>
    %c0_40 = arith.constant 0 : index
    %c0_41 = arith.constant 0 : index
    %90 = vector.load %arg7[%c0_40, %c0_41] : memref<32x1xf32, #tpu.memory_space<vmem>>, vector<32x1xf32>
    %cst_42 = arith.constant dense<0.000000e+00> : vector<32x256xf32>
    %91 = tpu.matmul %89, %88, %cst_42 {dimension_numbers = #tpu.dot_dimension_numbers<[1], [0], [0], [1], [0, 0, 1, 1], [], []>} : vector<32x32xf32>, vector<32x256xf32>, vector<32x256xf32> -> vector<32x256xf32>
    %92 = vector.broadcast %90 : vector<32x1xf32> to vector<32x256xf32>
    %93 = arith.addf %91, %92 : vector<32x256xf32>
    %cst_43 = arith.constant 5.000000e-01 : f32
    %94 = vector.broadcast %cst_43 : f32 to vector<32x256xf32>
    %95 = arith.mulf %94, %93 : vector<32x256xf32>
    %cst_44 = arith.constant 0.707106769 : f32
    %96 = vector.broadcast %cst_44 : f32 to vector<32x256xf32>
    %97 = arith.mulf %93, %96 : vector<32x256xf32>
    %98 = math.absf %97 : vector<32x256xf32>
    %cst_45 = arith.constant 0.327591091 : f32
    %99 = vector.broadcast %cst_45 : f32 to vector<32x256xf32>
    %100 = arith.mulf %99, %98 : vector<32x256xf32>
    %cst_46 = arith.constant 1.000000e+00 : f32
    %101 = vector.broadcast %cst_46 : f32 to vector<32x256xf32>
    %102 = arith.addf %101, %100 : vector<32x256xf32>
    %103 = tpu.reciprocal %102 {approx = true} : vector<32x256xf32> -> vector<32x256xf32>
    %cst_47 = arith.constant 1.06140542 : f32
    %104 = vector.broadcast %cst_47 : f32 to vector<32x256xf32>
    %105 = arith.mulf %104, %103 : vector<32x256xf32>
    %cst_48 = arith.constant 1.45315206 : f32
    %106 = vector.broadcast %cst_48 : f32 to vector<32x256xf32>
    %107 = arith.subf %105, %106 : vector<32x256xf32>
    %108 = arith.mulf %107, %103 : vector<32x256xf32>
    %cst_49 = arith.constant 1.42141378 : f32
    %109 = vector.broadcast %cst_49 : f32 to vector<32x256xf32>
    %110 = arith.addf %108, %109 : vector<32x256xf32>
    %111 = arith.mulf %110, %103 : vector<32x256xf32>
    %cst_50 = arith.constant 0.284496725 : f32
    %112 = vector.broadcast %cst_50 : f32 to vector<32x256xf32>
    %113 = arith.subf %111, %112 : vector<32x256xf32>
    %114 = arith.mulf %113, %103 : vector<32x256xf32>
    %cst_51 = arith.constant 0.254829586 : f32
    %115 = vector.broadcast %cst_51 : f32 to vector<32x256xf32>
    %116 = arith.addf %114, %115 : vector<32x256xf32>
    %117 = arith.mulf %116, %103 : vector<32x256xf32>
    %118 = arith.mulf %97, %97 : vector<32x256xf32>
    %cst_52 = arith.constant 0.000000e+00 : f32
    %119 = vector.broadcast %cst_52 : f32 to vector<32x256xf32>
    %120 = arith.subf %119, %118 : vector<32x256xf32>
    %121 = math.exp %120 : vector<32x256xf32>
    %122 = arith.mulf %117, %121 : vector<32x256xf32>
    %cst_53 = arith.constant 1.000000e+00 : f32
    %123 = vector.broadcast %cst_53 : f32 to vector<32x256xf32>
    %124 = arith.subf %123, %122 : vector<32x256xf32>
    %cst_54 = arith.constant 0.000000e+00 : f32
    %125 = vector.broadcast %cst_54 : f32 to vector<32x256xf32>
    %126 = arith.cmpf oge, %97, %125 : vector<32x256xf32>
    %cst_55 = arith.constant 0.000000e+00 : f32
    %127 = vector.broadcast %cst_55 : f32 to vector<32x256xf32>
    %128 = arith.subf %127, %124 : vector<32x256xf32>
    %129 = arith.select %126, %124, %128 : vector<32x256xi1>, vector<32x256xf32>
    %cst_56 = arith.constant 1.000000e+00 : f32
    %130 = vector.broadcast %cst_56 : f32 to vector<32x256xf32>
    %131 = arith.addf %130, %129 : vector<32x256xf32>
    %132 = arith.mulf %95, %131 : vector<32x256xf32>
    %c0_57 = arith.constant 0 : index
    %c0_58 = arith.constant 0 : index
    %133 = vector.load %arg8[%c0_57, %c0_58] : memref<4x32xf32, #tpu.memory_space<vmem>>, vector<4x32xf32>
    %c0_59 = arith.constant 0 : index
    %c0_60 = arith.constant 0 : index
    %134 = vector.load %arg9[%c0_59, %c0_60] : memref<4x1xf32, #tpu.memory_space<vmem>>, vector<4x1xf32>
    %cst_61 = arith.constant dense<0.000000e+00> : vector<4x256xf32>
    %135 = tpu.matmul %133, %132, %cst_61 {dimension_numbers = #tpu.dot_dimension_numbers<[1], [0], [0], [1], [0, 0, 1, 1], [], []>} : vector<4x32xf32>, vector<32x256xf32>, vector<4x256xf32> -> vector<4x256xf32>
    %136 = vector.broadcast %134 : vector<4x1xf32> to vector<4x256xf32>
    %137 = arith.addf %135, %136 : vector<4x256xf32>
    %c0_62 = arith.constant 0 : index
    %c0_63 = arith.constant 0 : index
    %138 = vector.load %arg10[%c0_62, %c0_63] : memref<4x256xf32, #tpu.memory_space<vmem>>, vector<4x256xf32>
    tpu.vector_store %arg10[%c0_62, %c0_63], %137 {strides = array<i32>} : memref<4x256xf32, #tpu.memory_space<vmem>>, vector<4x256xf32>,
    return
  }
  func.func @transform_0(%arg0: i32) -> (i32, i32) {
    %c0_i32 = arith.constant 0 : i32
    %c0_i32_0 = arith.constant 0 : i32
    return %c0_i32, %arg0 : i32, i32
  }
  func.func @transform_1(%arg0: i32) -> (i32, i32) {
    %c0_i32 = arith.constant 0 : i32
    %c0_i32_0 = arith.constant 0 : i32
    %c0_i32_1 = arith.constant 0 : i32
    return %c0_i32, %c0_i32_0 : i32, i32
  }
  func.func @transform_2(%arg0: i32) -> (i32, i32) {
    %c0_i32 = arith.constant 0 : i32
    %c0_i32_0 = arith.constant 0 : i32
    %c0_i32_1 = arith.constant 0 : i32
    return %c0_i32, %c0_i32_0 : i32, i32
  }
  func.func @transform_3(%arg0: i32) -> (i32, i32) {
    %c0_i32 = arith.constant 0 : i32
    %c0_i32_0 = arith.constant 0 : i32
    %c0_i32_1 = arith.constant 0 : i32
    return %c0_i32, %c0_i32_0 : i32, i32
  }
  func.func @transform_4(%arg0: i32) -> (i32, i32) {
    %c0_i32 = arith.constant 0 : i32
    %c0_i32_0 = arith.constant 0 : i32
    %c0_i32_1 = arith.constant 0 : i32
    return %c0_i32, %c0_i32_0 : i32, i32
  }
  func.func @transform_5(%arg0: i32) -> (i32, i32) {
    %c0_i32 = arith.constant 0 : i32
    %c0_i32_0 = arith.constant 0 : i32
    %c0_i32_1 = arith.constant 0 : i32
    return %c0_i32, %c0_i32_0 : i32, i32
  }
  func.func @transform_6(%arg0: i32) -> (i32, i32) {
    %c0_i32 = arith.constant 0 : i32
    %c0_i32_0 = arith.constant 0 : i32
    %c0_i32_1 = arith.constant 0 : i32
    return %c0_i32, %c0_i32_0 : i32, i32
  }
  func.func @transform_7(%arg0: i32) -> (i32, i32) {
    %c0_i32 = arith.constant 0 : i32
    %c0_i32_0 = arith.constant 0 : i32
    %c0_i32_1 = arith.constant 0 : i32
    return %c0_i32, %c0_i32_0 : i32, i32
  }
  func.func @transform_8(%arg0: i32) -> (i32, i32) {
    %c0_i32 = arith.constant 0 : i32
    %c0_i32_0 = arith.constant 0 : i32
    %c0_i32_1 = arith.constant 0 : i32
    return %c0_i32, %c0_i32_0 : i32, i32
  }
  func.func @transform_9(%arg0: i32) -> (i32, i32) {
    %c0_i32 = arith.constant 0 : i32
    %c0_i32_0 = arith.constant 0 : i32
    return %c0_i32, %arg0 : i32, i32
  }
}

</mosaic_0001>

<llo_original>
// kernel: tpu_custom_call.1
$region0: #{tpu_custom_call.1}
  #allocation0 [shape = 'u32[]', space=smem, size = 0x4, offset = 0x4, fixed_abs, tag = 'smem constant byte address 0x4 - core index']
  #allocation1 [shape = 'u32[144,128]{1,0:T(1,128)}', space=vmem, size = 0x12000, scoped, tag = 'internal scratch']
  %s0 = inlined_call_operand.vmem [shape: f32[3,200], index: 0, kind: input, shape index: {}]
  %s1 = inlined_call_operand.vmem [shape: f32[32,3], index: 1, kind: input, shape index: {}]
  %s2 = inlined_call_operand.vmem [shape: f32[32,1], index: 2, kind: input, shape index: {}]
  %s3 = inlined_call_operand.vmem [shape: f32[32,32], index: 3, kind: input, shape index: {}]
  %s4 = inlined_call_operand.vmem [shape: f32[32,1], index: 4, kind: input, shape index: {}]
  %s5 = inlined_call_operand.vmem [shape: f32[32,32], index: 5, kind: input, shape index: {}]
  %s6 = inlined_call_operand.vmem [shape: f32[32,1], index: 6, kind: input, shape index: {}]
  %s7 = inlined_call_operand.vmem [shape: f32[4,32], index: 7, kind: input, shape index: {}]
  %s8 = inlined_call_operand.vmem [shape: f32[4,1], index: 8, kind: input, shape index: {}]
  %s9 = inlined_call_operand.hbm [shape: f32[4,200], index: 9, kind: output, shape index: {}]
  %s10 = sld [smem:[#allocation0]]
  $region46: #{tpu_custom_call.1} parent=0
    _
  %s12 = ssub.s32 1, %s10
  %s13 = scalar_select 0, %s12, %s10
  $region1: #{tpu_custom_call.1} parent=0
    #allocation2 [shape = 'u8[4096]{0}', space=vmem, size = 0x1000, scoped, tag = 'output window, operand 0, single buffered']
    #allocation3 [shape = 's32[1]{0}', space=sflag, size = 0x4, scoped, tag = 'scoped memory for tpu_custom_call.1']
    %14 = vsyncpa [#allocation3], 0
    // Predicated region
    $region2: #{tpu_custom_call.1} parent=1 // pred_check
      _
    $region3: #{tpu_custom_call.1} parent=1 // pred_check_branch
      %16 = sbr.rel (0) target = $region5
    $region4: #{tpu_custom_call.1} parent=1 // pred_region
      _
    $region5: #{tpu_custom_call.1} parent=1 // pred_fallthru
      _
    // Predicated region
    $region6: #{tpu_custom_call.1} parent=1 // pred_check
      _
    $region7: #{tpu_custom_call.1} parent=1 // pred_check_branch
      %18 = sbr.rel (0) target = $region9
    $region8: #{tpu_custom_call.1} parent=1 // pred_region
      _
    $region9: #{tpu_custom_call.1} parent=1 // pred_fallthru
      _
    // Predicated region
    $region10: #{tpu_custom_call.1} parent=1 // pred_check
      _
    $region11: #{tpu_custom_call.1} parent=1 // pred_check_branch
      %20 = sbr.rel (0) target = $region13
    $region12: #{tpu_custom_call.1} parent=1 // pred_region
      _
    $region13: #{tpu_custom_call.1} parent=1 // pred_fallthru
      _
    // Predicated region
    $region14: #{tpu_custom_call.1} parent=1 // pred_check
      _
    $region15: #{tpu_custom_call.1} parent=1 // pred_check_branch
      %22 = sbr.rel (0) target = $region17
    $region16: #{tpu_custom_call.1} parent=1 // pred_region
      _
    $region17: #{tpu_custom_call.1} parent=1 // pred_fallthru
      _
    // Predicated region
    $region18: #{tpu_custom_call.1} parent=1 // pred_check
      _
    $region19: #{tpu_custom_call.1} parent=1 // pred_check_branch
      %24 = sbr.rel (0) target = $region21
    $region20: #{tpu_custom_call.1} parent=1 // pred_region
      _
    $region21: #{tpu_custom_call.1} parent=1 // pred_fallthru
      _
    // Predicated region
    $region22: #{tpu_custom_call.1} parent=1 // pred_check
      _
    $region23: #{tpu_custom_call.1} parent=1 // pred_check_branch
      %26 = sbr.rel (0) target = $region25
    $region24: #{tpu_custom_call.1} parent=1 // pred_region
      _
    $region25: #{tpu_custom_call.1} parent=1 // pred_fallthru
      _
    // Predicated region
    $region26: #{tpu_custom_call.1} parent=1 // pred_check
      _
    $region27: #{tpu_custom_call.1} parent=1 // pred_check_branch
      %28 = sbr.rel (0) target = $region29
    $region28: #{tpu_custom_call.1} parent=1 // pred_region
      _
    $region29: #{tpu_custom_call.1} parent=1 // pred_fallthru
      _
    // Predicated region
    $region30: #{tpu_custom_call.1} parent=1 // pred_check
      _
    $region31: #{tpu_custom_call.1} parent=1 // pred_check_branch
      %30 = sbr.rel (0) target = $region33
    $region32: #{tpu_custom_call.1} parent=1 // pred_region
      _
    $region33: #{tpu_custom_call.1} parent=1 // pred_fallthru
      _
    // Predicated region
    $region34: #{tpu_custom_call.1} parent=1 // pred_check
      _
    $region35: #{tpu_custom_call.1} parent=1 // pred_check_branch
      %32 = sbr.rel (0) target = $region37
    $region36: #{tpu_custom_call.1} parent=1 // pred_region
      _
    $region37: #{tpu_custom_call.1} parent=1 // pred_fallthru
      _
    %v33 = vld [vmem:[%s0] sm:$0x77]
    %v34 = vld [vmem:[%s1] sm:$0xff]
    %v35 = vld [vmem:[%s1 + $0x8] sm:$0xff]
    %v36 = vld [vmem:[%s1 + $0x10] sm:$0xff]
    %v37 = vld [vmem:[%s1 + $0x18] sm:$0xff]
    %v38 = vld [vmem:[%s2] sm:$0xff]
    %v39 = vld [vmem:[%s2 + $0x8] sm:$0xff]
    %v40 = vld [vmem:[%s2 + $0x10] sm:$0xff]
    %v41 = vld [vmem:[%s2 + $0x18] sm:$0xff]
    %43 = vset.pattern.permute.xlu0 0
    %44 = vperm.xlu0 %43, %v38
    %v45 = vpop.permute.xlu0 %44
    %48 = vset.pattern.permute.xlu0 0
    %49 = vperm.xlu0 %48, %v39
    %v50 = vpop.permute.xlu0 %49
    %53 = vset.pattern.permute.xlu0 0
    %54 = vperm.xlu0 %53, %v40
    %v55 = vpop.permute.xlu0 %54
    %58 = vset.pattern.permute.xlu0 0
    %59 = vperm.xlu0 %58, %v41
    %v60 = vpop.permute.xlu0 %59
    %v63 = vcombine.high %v33, %v33
    %vm64 = vcmask 23552
    %v66 = vsel %vm64, %v34, 0
    %v69 = vsel %vm64, %v35, 0
    %v72 = vsel %vm64, %v36, 0
    %v75 = vsel %vm64, %v37, 0
    %vm77 = vcmask 1042432
    %v78 = vsel %vm77, %v33, 0
    %v80 = vsel %vm77, %v63, 0
    %82 = vmatprep.subr.mxu0 0.0
    %83 = vmatpush1.msra.mxu0 0.0
    %84 = vmatprep.subr.mxu0 0.0
    %85 = vmatpush1.msra.mxu0 0.0
    %86 = vmatprep.subr.mxu0 0.0
    %87 = vmatpush1.msra.mxu0 0.0
    %88 = vmatprep.subr.mxu0 0.0
    %89 = vmatpush1.msra.mxu0 0.0
    %90 = vmatprep.subr.mxu0 0.0
    %91 = vmatpush1.msra.mxu0 0.0
    %92 = vmatprep.subr.mxu0 0.0
    %93 = vmatpush1.msra.mxu0 0.0
    %94 = vmatprep.subr.mxu0 0.0
    %95 = vmatpush1.msra.mxu0 0.0
    %96 = vmatprep.subr.mxu0 0.0
    %97 = vmatpush1.msra.mxu0 0.0
    %98 = vmatprep.subr.mxu0 0.0
    %99 = vmatpush1.msra.mxu0 0.0
    %100 = vmatprep.subr.mxu0 0.0
    %101 = vmatpush1.msra.mxu0 0.0
    %102 = vmatprep.subr.mxu0 0.0
    %103 = vmatpush1.msra.mxu0 0.0
    %104 = vmatprep.subr.mxu0 0.0
    %105 = vmatpush1.msra.mxu0 0.0
    %106 = vmatprep.subr.mxu0 0.0
    %107 = vmatpush1.msra.mxu0 0.0
    %108 = vmatprep.subr.mxu0 0.0
    %109 = vmatpush1.msra.mxu0 0.0
    %110 = vmatprep.subr.mxu0 0.0
    %111 = vmatpush1.msra.mxu0 0.0
    %112 = vmatprep.subr.mxu0 %v80
    %113 = vmatpush1.msra.mxu0 %v78
    %114 = vmatprep.subr.mxu0 0.0
    %115 = vmatpush2.msra.mxu0 0.0
    %116 = vmatprep.subr.mxu0 0.0
    %117 = vmatpush2.msra.mxu0 0.0
    %118 = vmatprep.subr.mxu0 0.0
    %119 = vmatpush2.msra.mxu0 0.0
    %120 = vmatprep.subr.mxu0 0.0
    %121 = vmatpush2.msra.mxu0 0.0
    %122 = vmatprep.subr.mxu0 0.0
    %123 = vmatpush2.msra.mxu0 0.0
    %124 = vmatprep.subr.mxu0 0.0
    %125 = vmatpush2.msra.mxu0 0.0
    %126 = vmatprep.subr.mxu0 0.0
    %127 = vmatpush2.msra.mxu0 0.0
    %128 = vmatprep.subr.mxu0 0.0
    %129 = vmatpush2.msra.mxu0 0.0
    %130 = vmatprep.subr.mxu0 0.0
    %131 = vmatpush2.msra.mxu0 0.0
    %132 = vmatprep.subr.mxu0 0.0
    %133 = vmatpush2.msra.mxu0 0.0
    %134 = vmatprep.subr.mxu0 0.0
    %135 = vmatpush2.msra.mxu0 0.0
    %136 = vmatprep.subr.mxu0 0.0
    %137 = vmatpush2.msra.mxu0 0.0
    %138 = vmatprep.subr.mxu0 0.0
    %139 = vmatpush2.msra.mxu0 0.0
    %140 = vmatprep.subr.mxu0 0.0
    %141 = vmatpush2.msra.mxu0 0.0
    %142 = vmatprep.subr.mxu0 0.0
    %143 = vmatpush2.msra.mxu0 0.0
    %144 = vmatprep.subr.mxu0 0.0
    %145 = vmatpush2.msra.mxu0 0.0
    %146 = vmatprep.mubr.f32.mxu0 0.0
    %147 = vmatmul.mubr.f32.gmra.mxu0 %v66
    %v148 = vpop.f32.mrf.mxu0
    %v149 = vadd.f32 %v45, %v148
    %v150 = vpop.f32.mrf.mxu0
    %v151 = vadd.f32 %v45, %v150
    %152 = vmatprep.mubr.f32.mxu0 0.0
    %153 = vmatmul.mubr.f32.gmra.mxu0 %v69
    %v154 = vpop.f32.mrf.mxu0
    %v155 = vadd.f32 %v50, %v154
    %v156 = vpop.f32.mrf.mxu0
    %v157 = vadd.f32 %v50, %v156
    %158 = vmatprep.mubr.f32.mxu0 0.0
    %159 = vmatmul.mubr.f32.gmra.mxu0 %v72
    %v160 = vpop.f32.mrf.mxu0
    %v161 = vadd.f32 %v55, %v160
    %v162 = vpop.f32.mrf.mxu0
    %v163 = vadd.f32 %v55, %v162
    %164 = vmatprep.mubr.f32.mxu0 0.0
    %165 = vmatmul.mubr.f32.gmra.mxu0 %v75
    %v166 = vpop.f32.mrf.mxu0
    %v167 = vadd.f32 %v60, %v166
    %v168 = vpop.f32.mrf.mxu0
    %v169 = vadd.f32 %v60, %v168
    %170 = vdwg.mxu0
    %v171 = vmul.f32 %v149, 0.5
    %v172 = vmul.f32 %v151, 0.5
    %v173 = vmul.f32 %v155, 0.5
    %v174 = vmul.f32 %v157, 0.5
    %v175 = vmul.f32 %v161, 0.5
    %v176 = vmul.f32 %v163, 0.5
    %v177 = vmul.f32 %v167, 0.5
    %v178 = vmul.f32 %v169, 0.5
    %v179 = vmul.f32 %v149, 0.70710677
    %v180 = vmul.f32 %v151, 0.70710677
    %v181 = vmul.f32 %v155, 0.70710677
    %v182 = vmul.f32 %v157, 0.70710677
    %v183 = vmul.f32 %v161, 0.70710677
    %v184 = vmul.f32 %v163, 0.70710677
    %v185 = vmul.f32 %v167, 0.70710677
    %v186 = vmul.f32 %v169, 0.70710677
    %v187 = vand.u32 2147483647, %v179
    %v188 = vand.u32 2147483647, %v180
    %v189 = vand.u32 2147483647, %v181
    %v190 = vand.u32 2147483647, %v182
    %v191 = vand.u32 2147483647, %v183
    %v192 = vand.u32 2147483647, %v184
    %v193 = vand.u32 2147483647, %v185
    %v194 = vand.u32 2147483647, %v186
    %v195 = vmul.f32 %v187, 0.3275911
    %v196 = vmul.f32 %v188, 0.3275911
    %v197 = vmul.f32 %v189, 0.3275911
    %v198 = vmul.f32 %v190, 0.3275911
    %v199 = vmul.f32 %v191, 0.3275911
    %v200 = vmul.f32 %v192, 0.3275911
    %v201 = vmul.f32 %v193, 0.3275911
    %v202 = vmul.f32 %v194, 0.3275911
    %v203 = vadd.f32 %v195, 1.0
    %v204 = vadd.f32 %v196, 1.0
    %v205 = vadd.f32 %v197, 1.0
    %v206 = vadd.f32 %v198, 1.0
    %v207 = vadd.f32 %v199, 1.0
    %v208 = vadd.f32 %v200, 1.0
    %v209 = vadd.f32 %v201, 1.0
    %v210 = vadd.f32 %v202, 1.0
    %v211 = vrcp.pop %v203
    %v212 = vrcp.pop %v204
    %v213 = vrcp.pop %v205
    %v214 = vrcp.pop %v206
    %v215 = vrcp.pop %v207
    %v216 = vrcp.pop %v208
    %v217 = vrcp.pop %v209
    %v218 = vrcp.pop %v210
    %v219 = vmul.f32 %v211, 1.0614054
    %v220 = vmul.f32 %v212, 1.0614054
    %v221 = vmul.f32 %v213, 1.0614054
    %v222 = vmul.f32 %v214, 1.0614054
    %v223 = vmul.f32 %v215, 1.0614054
    %v224 = vmul.f32 %v216, 1.0614054
    %v225 = vmul.f32 %v217, 1.0614054
    %v226 = vmul.f32 %v218, 1.0614054
    %v227 = vsub.f32 %v219, 1.4531521
    %v228 = vsub.f32 %v220, 1.4531521
    %v229 = vsub.f32 %v221, 1.4531521
    %v230 = vsub.f32 %v222, 1.4531521
    %v231 = vsub.f32 %v223, 1.4531521
    %v232 = vsub.f32 %v224, 1.4531521
    %v233 = vsub.f32 %v225, 1.4531521
    %v234 = vsub.f32 %v226, 1.4531521
    %v235 = vmul.f32 %v227, %v211
    %v236 = vmul.f32 %v228, %v212
    %v237 = vmul.f32 %v229, %v213
    %v238 = vmul.f32 %v230, %v214
    %v239 = vmul.f32 %v231, %v215
    %v240 = vmul.f32 %v232, %v216
    %v241 = vmul.f32 %v233, %v217
    %v242 = vmul.f32 %v234, %v218
    %v243 = vadd.f32 %v235, 1.4214138
    %v244 = vadd.f32 %v236, 1.4214138
    %v245 = vadd.f32 %v237, 1.4214138
    %v246 = vadd.f32 %v238, 1.4214138
    %v247 = vadd.f32 %v239, 1.4214138
    %v248 = vadd.f32 %v240, 1.4214138
    %v249 = vadd.f32 %v241, 1.4214138
    %v250 = vadd.f32 %v242, 1.4214138
    %v251 = vmul.f32 %v243, %v211
    %v252 = vmul.f32 %v244, %v212
    %v253 = vmul.f32 %v245, %v213
    %v254 = vmul.f32 %v246, %v214
    %v255 = vmul.f32 %v247, %v215
    %v256 = vmul.f32 %v248, %v216
    %v257 = vmul.f32 %v249, %v217
    %v258 = vmul.f32 %v250, %v218
    %v259 = vsub.f32 %v251, 0.28449672
    %v260 = vsub.f32 %v252, 0.28449672
    %v261 = vsub.f32 %v253, 0.28449672
    %v262 = vsub.f32 %v254, 0.28449672
    %v263 = vsub.f32 %v255, 0.28449672
    %v264 = vsub.f32 %v256, 0.28449672
    %v265 = vsub.f32 %v257, 0.28449672
    %v266 = vsub.f32 %v258, 0.28449672
    %v267 = vmul.f32 %v259, %v211
    %v268 = vmul.f32 %v260, %v212
    %v269 = vmul.f32 %v261, %v213
    %v270 = vmul.f32 %v262, %v214
    %v271 = vmul.f32 %v263, %v215
    %v272 = vmul.f32 %v264, %v216
    %v273 = vmul.f32 %v265, %v217
    %v274 = vmul.f32 %v266, %v218
    %v275 = vadd.f32 %v267, 0.2548296
    %v276 = vadd.f32 %v268, 0.2548296
    %v277 = vadd.f32 %v269, 0.2548296
    %v278 = vadd.f32 %v270, 0.2548296
    %v279 = vadd.f32 %v271, 0.2548296
    %v280 = vadd.f32 %v272, 0.2548296
    %v281 = vadd.f32 %v273, 0.2548296
    %v282 = vadd.f32 %v274, 0.2548296
    %v283 = vmul.f32 %v275, %v211
    %v284 = vmul.f32 %v276, %v212
    %v285 = vmul.f32 %v277, %v213
    %v286 = vmul.f32 %v278, %v214
    %v287 = vmul.f32 %v279, %v215
    %v288 = vmul.f32 %v280, %v216
    %v289 = vmul.f32 %v281, %v217
    %v290 = vmul.f32 %v282, %v218
    %v291 = vmul.f32 %v179, %v179
    %v292 = vmul.f32 %v180, %v180
    %v293 = vmul.f32 %v181, %v181
    %v294 = vmul.f32 %v182, %v182
    %v295 = vmul.f32 %v183, %v183
    %v296 = vmul.f32 %v184, %v184
    %v297 = vmul.f32 %v185, %v185
    %v298 = vmul.f32 %v186, %v186
    %v299 = vsub.f32 0.0, %v291
    %v300 = vsub.f32 0.0, %v292
    %v301 = vsub.f32 0.0, %v293
    %v302 = vsub.f32 0.0, %v294
    %v303 = vsub.f32 0.0, %v295
    %v304 = vsub.f32 0.0, %v296
    %v305 = vsub.f32 0.0, %v297
    %v306 = vsub.f32 0.0, %v298
    %v307 = vmul.f32 %v299, 1.442695
    %v308 = vpow.pop %v307
    %v309 = vmul.f32 %v300, 1.442695
    %v310 = vpow.pop %v309
    %v311 = vmul.f32 %v301, 1.442695
    %v312 = vpow.pop %v311
    %v313 = vmul.f32 %v302, 1.442695
    %v314 = vpow.pop %v313
    %v315 = vmul.f32 %v303, 1.442695
    %v316 = vpow.pop %v315
    %v317 = vmul.f32 %v304, 1.442695
    %v318 = vpow.pop %v317
    %v319 = vmul.f32 %v305, 1.442695
    %v320 = vpow.pop %v319
    %v321 = vmul.f32 %v306, 1.442695
    %v322 = vpow.pop %v321
    %v323 = vmul.f32 %v283, %v308
    %v324 = vmul.f32 %v284, %v310
    %v325 = vmul.f32 %v285, %v312
    %v326 = vmul.f32 %v286, %v314
    %v327 = vmul.f32 %v287, %v316
    %v328 = vmul.f32 %v288, %v318
    %v329 = vmul.f32 %v289, %v320
    %v330 = vmul.f32 %v290, %v322
    %v331 = vsub.f32 1.0, %v323
    %v332 = vsub.f32 1.0, %v324
    %v333 = vsub.f32 1.0, %v325
    %v334 = vsub.f32 1.0, %v326
    %v335 = vsub.f32 1.0, %v327
    %v336 = vsub.f32 1.0, %v328
    %v337 = vsub.f32 1.0, %v329
    %v338 = vsub.f32 1.0, %v330
    %vm339 = vcmp.ge.f32.partialorder %v179, 0.0
    %vm340 = vcmp.ge.f32.partialorder %v180, 0.0
    %vm341 = vcmp.ge.f32.partialorder %v181, 0.0
    %vm342 = vcmp.ge.f32.partialorder %v182, 0.0
    %vm343 = vcmp.ge.f32.partialorder %v183, 0.0
    %vm344 = vcmp.ge.f32.partialorder %v184, 0.0
    %vm345 = vcmp.ge.f32.partialorder %v185, 0.0
    %vm346 = vcmp.ge.f32.partialorder %v186, 0.0
    %v347 = vsub.f32 0.0, %v331
    %v348 = vsub.f32 0.0, %v332
    %v349 = vsub.f32 0.0, %v333
    %v350 = vsub.f32 0.0, %v334
    %v351 = vsub.f32 0.0, %v335
    %v352 = vsub.f32 0.0, %v336
    %v353 = vsub.f32 0.0, %v337
    %v354 = vsub.f32 0.0, %v338
    %v355 = vsel %vm339, %v331, %v347
    %v356 = vsel %vm340, %v332, %v348
    %v357 = vsel %vm341, %v333, %v349
    %v358 = vsel %vm342, %v334, %v350
    %v359 = vsel %vm343, %v335, %v351
    %v360 = vsel %vm344, %v336, %v352
    %v361 = vsel %vm345, %v337, %v353
    %v362 = vsel %vm346, %v338, %v354
    %v363 = vadd.f32 %v355, 1.0
    %v364 = vadd.f32 %v356, 1.0
    %v365 = vadd.f32 %v357, 1.0
    %v366 = vadd.f32 %v358, 1.0
    %v367 = vadd.f32 %v359, 1.0
    %v368 = vadd.f32 %v360, 1.0
    %v369 = vadd.f32 %v361, 1.0
    %v370 = vadd.f32 %v362, 1.0
    %v371 = vmul.f32 %v171, %v363
    %v372 = vmul.f32 %v172, %v364
    %v373 = vmul.f32 %v173, %v365
    %v374 = vmul.f32 %v174, %v366
    %v375 = vmul.f32 %v175, %v367
    %v376 = vmul.f32 %v176, %v368
    %v377 = vmul.f32 %v177, %v369
    %v378 = vmul.f32 %v178, %v370
    %v379 = vld [vmem:[%s3] sm:$0xff]
    %v380 = vld [vmem:[%s3 + $0x8] sm:$0xff]
    %v381 = vld [vmem:[%s3 + $0x10] sm:$0xff]
    %v382 = vld [vmem:[%s3 + $0x18] sm:$0xff]
    %v383 = vld [vmem:[%s4] sm:$0xff]
    %v384 = vld [vmem:[%s4 + $0x8] sm:$0xff]
    %v385 = vld [vmem:[%s4 + $0x10] sm:$0xff]
    %v386 = vld [vmem:[%s4 + $0x18] sm:$0xff]
    %388 = vset.pattern.permute.xlu0 0
    %389 = vperm.xlu0 %388, %v383
    %v390 = vpop.permute.xlu0 %389
    %393 = vset.pattern.permute.xlu0 0
    %394 = vperm.xlu0 %393, %v384
    %v395 = vpop.permute.xlu0 %394
    %398 = vset.pattern.permute.xlu0 0
    %399 = vperm.xlu0 %398, %v385
    %v400 = vpop.permute.xlu0 %399
    %403 = vset.pattern.permute.xlu0 0
    %404 = vperm.xlu0 %403, %v386
    %v405 = vpop.permute.xlu0 %404
    %vm407 = vcmask 261120
    %v409 = vsel %vm407, %v379, 0
    %v412 = vsel %vm407, %v380, 0
    %v415 = vsel %vm407, %v381, 0
    %v418 = vsel %vm407, %v382, 0
    %420 = vmatprep.subr.mxu0 0.0
    %421 = vmatpush1.msra.mxu0 0.0
    %422 = vmatprep.subr.mxu0 0.0
    %423 = vmatpush1.msra.mxu0 0.0
    %424 = vmatprep.subr.mxu0 0.0
    %425 = vmatpush1.msra.mxu0 0.0
    %426 = vmatprep.subr.mxu0 0.0
    %427 = vmatpush1.msra.mxu0 0.0
    %428 = vmatprep.subr.mxu0 0.0
    %429 = vmatpush1.msra.mxu0 0.0
    %430 = vmatprep.subr.mxu0 0.0
    %431 = vmatpush1.msra.mxu0 0.0
    %432 = vmatprep.subr.mxu0 0.0
    %433 = vmatpush1.msra.mxu0 0.0
    %434 = vmatprep.subr.mxu0 0.0
    %435 = vmatpush1.msra.mxu0 0.0
    %436 = vmatprep.subr.mxu0 0.0
    %437 = vmatpush1.msra.mxu0 0.0
    %438 = vmatprep.subr.mxu0 0.0
    %439 = vmatpush1.msra.mxu0 0.0
    %440 = vmatprep.subr.mxu0 0.0
    %441 = vmatpush1.msra.mxu0 0.0
    %442 = vmatprep.subr.mxu0 0.0
    %443 = vmatpush1.msra.mxu0 0.0
    %444 = vmatprep.subr.mxu0 %v378
    %445 = vmatpush1.msra.mxu0 %v377
    %446 = vmatprep.subr.mxu0 %v376
    %447 = vmatpush1.msra.mxu0 %v375
    %448 = vmatprep.subr.mxu0 %v374
    %449 = vmatpush1.msra.mxu0 %v373
    %450 = vmatprep.subr.mxu0 %v372
    %451 = vmatpush1.msra.mxu0 %v371
    %452 = vmatprep.subr.mxu0 0.0
    %453 = vmatpush2.msra.mxu0 0.0
    %454 = vmatprep.subr.mxu0 0.0
    %455 = vmatpush2.msra.mxu0 0.0
    %456 = vmatprep.subr.mxu0 0.0
    %457 = vmatpush2.msra.mxu0 0.0
    %458 = vmatprep.subr.mxu0 0.0
    %459 = vmatpush2.msra.mxu0 0.0
    %460 = vmatprep.subr.mxu0 0.0
    %461 = vmatpush2.msra.mxu0 0.0
    %462 = vmatprep.subr.mxu0 0.0
    %463 = vmatpush2.msra.mxu0 0.0
    %464 = vmatprep.subr.mxu0 0.0
    %465 = vmatpush2.msra.mxu0 0.0
    %466 = vmatprep.subr.mxu0 0.0
    %467 = vmatpush2.msra.mxu0 0.0
    %468 = vmatprep.subr.mxu0 0.0
    %469 = vmatpush2.msra.mxu0 0.0
    %470 = vmatprep.subr.mxu0 0.0
    %471 = vmatpush2.msra.mxu0 0.0
    %472 = vmatprep.subr.mxu0 0.0
    %473 = vmatpush2.msra.mxu0 0.0
    %474 = vmatprep.subr.mxu0 0.0
    %475 = vmatpush2.msra.mxu0 0.0
    %476 = vmatprep.subr.mxu0 0.0
    %477 = vmatpush2.msra.mxu0 0.0
    %478 = vmatprep.subr.mxu0 0.0
    %479 = vmatpush2.msra.mxu0 0.0
    %480 = vmatprep.subr.mxu0 0.0
    %481 = vmatpush2.msra.mxu0 0.0
    %482 = vmatprep.subr.mxu0 0.0
    %483 = vmatpush2.msra.mxu0 0.0
    %484 = vmatprep.mubr.f32.mxu0 0.0
    %485 = vmatmul.mubr.f32.gmra.mxu0 %v409
    %v486 = vpop.f32.mrf.mxu0
    %v487 = vadd.f32 %v390, %v486
    %v488 = vpop.f32.mrf.mxu0
    %v489 = vadd.f32 %v390, %v488
    %490 = vmatprep.mubr.f32.mxu0 0.0
    %491 = vmatmul.mubr.f32.gmra.mxu0 %v412
    %v492 = vpop.f32.mrf.mxu0
    %v493 = vadd.f32 %v395, %v492
    %v494 = vpop.f32.mrf.mxu0
    %v495 = vadd.f32 %v395, %v494
    %496 = vmatprep.mubr.f32.mxu0 0.0
    %497 = vmatmul.mubr.f32.gmra.mxu0 %v415
    %v498 = vpop.f32.mrf.mxu0
    %v499 = vadd.f32 %v400, %v498
    %v500 = vpop.f32.mrf.mxu0
    %v501 = vadd.f32 %v400, %v500
    %502 = vmatprep.mubr.f32.mxu0 0.0
    %503 = vmatmul.mubr.f32.gmra.mxu0 %v418
    %v504 = vpop.f32.mrf.mxu0
    %v505 = vadd.f32 %v405, %v504
    %v506 = vpop.f32.mrf.mxu0
    %v507 = vadd.f32 %v405, %v506
    %508 = vdwg.mxu0
    %v509 = vmul.f32 %v487, 0.5
    %v510 = vmul.f32 %v489, 0.5
    %v511 = vmul.f32 %v493, 0.5
    %v512 = vmul.f32 %v495, 0.5
    %v513 = vmul.f32 %v499, 0.5
    %v514 = vmul.f32 %v501, 0.5
    %v515 = vmul.f32 %v505, 0.5
    %v516 = vmul.f32 %v507, 0.5
    %v517 = vmul.f32 %v487, 0.70710677
    %v518 = vmul.f32 %v489, 0.70710677
    %v519 = vmul.f32 %v493, 0.70710677
    %v520 = vmul.f32 %v495, 0.70710677
    %v521 = vmul.f32 %v499, 0.70710677
    %v522 = vmul.f32 %v501, 0.70710677
    %v523 = vmul.f32 %v505, 0.70710677
    %v524 = vmul.f32 %v507, 0.70710677
    %v525 = vand.u32 2147483647, %v517
    %v526 = vand.u32 2147483647, %v518
    %v527 = vand.u32 2147483647, %v519
    %v528 = vand.u32 2147483647, %v520
    %v529 = vand.u32 2147483647, %v521
    %v530 = vand.u32 2147483647, %v522
    %v531 = vand.u32 2147483647, %v523
    %v532 = vand.u32 2147483647, %v524
    %v533 = vmul.f32 %v525, 0.3275911
    %v534 = vmul.f32 %v526, 0.3275911
    %v535 = vmul.f32 %v527, 0.3275911
    %v536 = vmul.f32 %v528, 0.3275911
    %v537 = vmul.f32 %v529, 0.3275911
    %v538 = vmul.f32 %v530, 0.3275911
    %v539 = vmul.f32 %v531, 0.3275911
    %v540 = vmul.f32 %v532, 0.3275911
    %v541 = vadd.f32 %v533, 1.0
    %v542 = vadd.f32 %v534, 1.0
    %v543 = vadd.f32 %v535, 1.0
    %v544 = vadd.f32 %v536, 1.0
    %v545 = vadd.f32 %v537, 1.0
    %v546 = vadd.f32 %v538, 1.0
    %v547 = vadd.f32 %v539, 1.0
    %v548 = vadd.f32 %v540, 1.0
    %v549 = vrcp.pop %v541
    %v550 = vrcp.pop %v542
    %v551 = vrcp.pop %v543
    %v552 = vrcp.pop %v544
    %v553 = vrcp.pop %v545
    %v554 = vrcp.pop %v546
    %v555 = vrcp.pop %v547
    %v556 = vrcp.pop %v548
    %v557 = vmul.f32 %v549, 1.0614054
    %v558 = vmul.f32 %v550, 1.0614054
    %v559 = vmul.f32 %v551, 1.0614054
    %v560 = vmul.f32 %v552, 1.0614054
    %v561 = vmul.f32 %v553, 1.0614054
    %v562 = vmul.f32 %v554, 1.0614054
    %v563 = vmul.f32 %v555, 1.0614054
    %v564 = vmul.f32 %v556, 1.0614054
    %v565 = vsub.f32 %v557, 1.4531521
    %v566 = vsub.f32 %v558, 1.4531521
    %v567 = vsub.f32 %v559, 1.4531521
    %v568 = vsub.f32 %v560, 1.4531521
    %v569 = vsub.f32 %v561, 1.4531521
    %v570 = vsub.f32 %v562, 1.4531521
    %v571 = vsub.f32 %v563, 1.4531521
    %v572 = vsub.f32 %v564, 1.4531521
    %v573 = vmul.f32 %v565, %v549
    %v574 = vmul.f32 %v566, %v550
    %v575 = vmul.f32 %v567, %v551
    %v576 = vmul.f32 %v568, %v552
    %v577 = vmul.f32 %v569, %v553
    %v578 = vmul.f32 %v570, %v554
    %v579 = vmul.f32 %v571, %v555
    %v580 = vmul.f32 %v572, %v556
    %v581 = vadd.f32 %v573, 1.4214138
    %v582 = vadd.f32 %v574, 1.4214138
    %v583 = vadd.f32 %v575, 1.4214138
    %v584 = vadd.f32 %v576, 1.4214138
    %v585 = vadd.f32 %v577, 1.4214138
    %v586 = vadd.f32 %v578, 1.4214138
    %v587 = vadd.f32 %v579, 1.4214138
    %v588 = vadd.f32 %v580, 1.4214138
    %v589 = vmul.f32 %v581, %v549
    %v590 = vmul.f32 %v582, %v550
    %v591 = vmul.f32 %v583, %v551
    %v592 = vmul.f32 %v584, %v552
    %v593 = vmul.f32 %v585, %v553
    %v594 = vmul.f32 %v586, %v554
    %v595 = vmul.f32 %v587, %v555
    %v596 = vmul.f32 %v588, %v556
    %v597 = vsub.f32 %v589, 0.28449672
    %v598 = vsub.f32 %v590, 0.28449672
    %v599 = vsub.f32 %v591, 0.28449672
    %v600 = vsub.f32 %v592, 0.28449672
    %v601 = vsub.f32 %v593, 0.28449672
    %v602 = vsub.f32 %v594, 0.28449672
    %v603 = vsub.f32 %v595, 0.28449672
    %v604 = vsub.f32 %v596, 0.28449672
    %v605 = vmul.f32 %v597, %v549
    %v606 = vmul.f32 %v598, %v550
    %v607 = vmul.f32 %v599, %v551
    %v608 = vmul.f32 %v600, %v552
    %v609 = vmul.f32 %v601, %v553
    %v610 = vmul.f32 %v602, %v554
    %v611 = vmul.f32 %v603, %v555
    %v612 = vmul.f32 %v604, %v556
    %v613 = vadd.f32 %v605, 0.2548296
    %v614 = vadd.f32 %v606, 0.2548296
    %v615 = vadd.f32 %v607, 0.2548296
    %v616 = vadd.f32 %v608, 0.2548296
    %v617 = vadd.f32 %v609, 0.2548296
    %v618 = vadd.f32 %v610, 0.2548296
    %v619 = vadd.f32 %v611, 0.2548296
    %v620 = vadd.f32 %v612, 0.2548296
    %v621 = vmul.f32 %v613, %v549
    %v622 = vmul.f32 %v614, %v550
    %v623 = vmul.f32 %v615, %v551
    %v624 = vmul.f32 %v616, %v552
    %v625 = vmul.f32 %v617, %v553
    %v626 = vmul.f32 %v618, %v554
    %v627 = vmul.f32 %v619, %v555
    %v628 = vmul.f32 %v620, %v556
    %v629 = vmul.f32 %v517, %v517
    %v630 = vmul.f32 %v518, %v518
    %v631 = vmul.f32 %v519, %v519
    %v632 = vmul.f32 %v520, %v520
    %v633 = vmul.f32 %v521, %v521
    %v634 = vmul.f32 %v522, %v522
    %v635 = vmul.f32 %v523, %v523
    %v636 = vmul.f32 %v524, %v524
    %v637 = vsub.f32 0.0, %v629
    %v638 = vsub.f32 0.0, %v630
    %v639 = vsub.f32 0.0, %v631
    %v640 = vsub.f32 0.0, %v632
    %v641 = vsub.f32 0.0, %v633
    %v642 = vsub.f32 0.0, %v634
    %v643 = vsub.f32 0.0, %v635
    %v644 = vsub.f32 0.0, %v636
    %v645 = vmul.f32 %v637, 1.442695
    %v646 = vpow.pop %v645
    %v647 = vmul.f32 %v638, 1.442695
    %v648 = vpow.pop %v647
    %v649 = vmul.f32 %v639, 1.442695
    %v650 = vpow.pop %v649
    %v651 = vmul.f32 %v640, 1.442695
    %v652 = vpow.pop %v651
    %v653 = vmul.f32 %v641, 1.442695
    %v654 = vpow.pop %v653
    %v655 = vmul.f32 %v642, 1.442695
    %v656 = vpow.pop %v655
    %v657 = vmul.f32 %v643, 1.442695
    %v658 = vpow.pop %v657
    %v659 = vmul.f32 %v644, 1.442695
    %v660 = vpow.pop %v659
    %v661 = vmul.f32 %v621, %v646
    %v662 = vmul.f32 %v622, %v648
    %v663 = vmul.f32 %v623, %v650
    %v664 = vmul.f32 %v624, %v652
    %v665 = vmul.f32 %v625, %v654
    %v666 = vmul.f32 %v626, %v656
    %v667 = vmul.f32 %v627, %v658
    %v668 = vmul.f32 %v628, %v660
    %v669 = vsub.f32 1.0, %v661
    %v670 = vsub.f32 1.0, %v662
    %v671 = vsub.f32 1.0, %v663
    %v672 = vsub.f32 1.0, %v664
    %v673 = vsub.f32 1.0, %v665
    %v674 = vsub.f32 1.0, %v666
    %v675 = vsub.f32 1.0, %v667
    %v676 = vsub.f32 1.0, %v668
    %vm677 = vcmp.ge.f32.partialorder %v517, 0.0
    %vm678 = vcmp.ge.f32.partialorder %v518, 0.0
    %vm679 = vcmp.ge.f32.partialorder %v519, 0.0
    %vm680 = vcmp.ge.f32.partialorder %v520, 0.0
    %vm681 = vcmp.ge.f32.partialorder %v521, 0.0
    %vm682 = vcmp.ge.f32.partialorder %v522, 0.0
    %vm683 = vcmp.ge.f32.partialorder %v523, 0.0
    %vm684 = vcmp.ge.f32.partialorder %v524, 0.0
    %v685 = vsub.f32 0.0, %v669
    %v686 = vsub.f32 0.0, %v670
    %v687 = vsub.f32 0.0, %v671
    %v688 = vsub.f32 0.0, %v672
    %v689 = vsub.f32 0.0, %v673
    %v690 = vsub.f32 0.0, %v674
    %v691 = vsub.f32 0.0, %v675
    %v692 = vsub.f32 0.0, %v676
    %v693 = vsel %vm677, %v669, %v685
    %v694 = vsel %vm678, %v670, %v686
    %v695 = vsel %vm679, %v671, %v687
    %v696 = vsel %vm680, %v672, %v688
    %v697 = vsel %vm681, %v673, %v689
    %v698 = vsel %vm682, %v674, %v690
    %v699 = vsel %vm683, %v675, %v691
    %v700 = vsel %vm684, %v676, %v692
    %v701 = vadd.f32 %v693, 1.0
    %v702 = vadd.f32 %v694, 1.0
    %v703 = vadd.f32 %v695, 1.0
    %v704 = vadd.f32 %v696, 1.0
    %v705 = vadd.f32 %v697, 1.0
    %v706 = vadd.f32 %v698, 1.0
    %v707 = vadd.f32 %v699, 1.0
    %v708 = vadd.f32 %v700, 1.0
    %v709 = vmul.f32 %v509, %v701
    %v710 = vmul.f32 %v510, %v702
    %v711 = vmul.f32 %v511, %v703
    %v712 = vmul.f32 %v512, %v704
    %v713 = vmul.f32 %v513, %v705
    %v714 = vmul.f32 %v514, %v706
    %v715 = vmul.f32 %v515, %v707
    %v716 = vmul.f32 %v516, %v708
    %v717 = vld [vmem:[%s5] sm:$0xff]
    %v718 = vld [vmem:[%s5 + $0x8] sm:$0xff]
    %v719 = vld [vmem:[%s5 + $0x10] sm:$0xff]
    %v720 = vld [vmem:[%s5 + $0x18] sm:$0xff]
    %v721 = vld [vmem:[%s6] sm:$0xff]
    %v722 = vld [vmem:[%s6 + $0x8] sm:$0xff]
    %v723 = vld [vmem:[%s6 + $0x10] sm:$0xff]
    %v724 = vld [vmem:[%s6 + $0x18] sm:$0xff]
    %726 = vset.pattern.permute.xlu0 0
    %727 = vperm.xlu0 %726, %v721
    %v728 = vpop.permute.xlu0 %727
    %731 = vset.pattern.permute.xlu0 0
    %732 = vperm.xlu0 %731, %v722
    %v733 = vpop.permute.xlu0 %732
    %736 = vset.pattern.permute.xlu0 0
    %737 = vperm.xlu0 %736, %v723
    %v738 = vpop.permute.xlu0 %737
    %741 = vset.pattern.permute.xlu0 0
    %742 = vperm.xlu0 %741, %v724
    %v743 = vpop.permute.xlu0 %742
    %v746 = vsel %vm407, %v717, 0
    %v749 = vsel %vm407, %v718, 0
    %v752 = vsel %vm407, %v719, 0
    %v755 = vsel %vm407, %v720, 0
    %757 = vmatprep.subr.mxu0 0.0
    %758 = vmatpush1.msra.mxu0 0.0
    %759 = vmatprep.subr.mxu0 0.0
    %760 = vmatpush1.msra.mxu0 0.0
    %761 = vmatprep.subr.mxu0 0.0
    %762 = vmatpush1.msra.mxu0 0.0
    %763 = vmatprep.subr.mxu0 0.0
    %764 = vmatpush1.msra.mxu0 0.0
    %765 = vmatprep.subr.mxu0 0.0
    %766 = vmatpush1.msra.mxu0 0.0
    %767 = vmatprep.subr.mxu0 0.0
    %768 = vmatpush1.msra.mxu0 0.0
    %769 = vmatprep.subr.mxu0 0.0
    %770 = vmatpush1.msra.mxu0 0.0
    %771 = vmatprep.subr.mxu0 0.0
    %772 = vmatpush1.msra.mxu0 0.0
    %773 = vmatprep.subr.mxu0 0.0
    %774 = vmatpush1.msra.mxu0 0.0
    %775 = vmatprep.subr.mxu0 0.0
    %776 = vmatpush1.msra.mxu0 0.0
    %777 = vmatprep.subr.mxu0 0.0
    %778 = vmatpush1.msra.mxu0 0.0
    %779 = vmatprep.subr.mxu0 0.0
    %780 = vmatpush1.msra.mxu0 0.0
    %781 = vmatprep.subr.mxu0 %v716
    %782 = vmatpush1.msra.mxu0 %v715
    %783 = vmatprep.subr.mxu0 %v714
    %784 = vmatpush1.msra.mxu0 %v713
    %785 = vmatprep.subr.mxu0 %v712
    %786 = vmatpush1.msra.mxu0 %v711
    %787 = vmatprep.subr.mxu0 %v710
    %788 = vmatpush1.msra.mxu0 %v709
    %789 = vmatprep.subr.mxu0 0.0
    %790 = vmatpush2.msra.mxu0 0.0
    %791 = vmatprep.subr.mxu0 0.0
    %792 = vmatpush2.msra.mxu0 0.0
    %793 = vmatprep.subr.mxu0 0.0
    %794 = vmatpush2.msra.mxu0 0.0
    %795 = vmatprep.subr.mxu0 0.0
    %796 = vmatpush2.msra.mxu0 0.0
    %797 = vmatprep.subr.mxu0 0.0
    %798 = vmatpush2.msra.mxu0 0.0
    %799 = vmatprep.subr.mxu0 0.0
    %800 = vmatpush2.msra.mxu0 0.0
    %801 = vmatprep.subr.mxu0 0.0
    %802 = vmatpush2.msra.mxu0 0.0
    %803 = vmatprep.subr.mxu0 0.0
    %804 = vmatpush2.msra.mxu0 0.0
    %805 = vmatprep.subr.mxu0 0.0
    %806 = vmatpush2.msra.mxu0 0.0
    %807 = vmatprep.subr.mxu0 0.0
    %808 = vmatpush2.msra.mxu0 0.0
    %809 = vmatprep.subr.mxu0 0.0
    %810 = vmatpush2.msra.mxu0 0.0
    %811 = vmatprep.subr.mxu0 0.0
    %812 = vmatpush2.msra.mxu0 0.0
    %813 = vmatprep.subr.mxu0 0.0
    %814 = vmatpush2.msra.mxu0 0.0
    %815 = vmatprep.subr.mxu0 0.0
    %816 = vmatpush2.msra.mxu0 0.0
    %817 = vmatprep.subr.mxu0 0.0
    %818 = vmatpush2.msra.mxu0 0.0
    %819 = vmatprep.subr.mxu0 0.0
    %820 = vmatpush2.msra.mxu0 0.0
    %821 = vmatprep.mubr.f32.mxu0 0.0
    %822 = vmatmul.mubr.f32.gmra.mxu0 %v746
    %v823 = vpop.f32.mrf.mxu0
    %v824 = vadd.f32 %v728, %v823
    %v825 = vpop.f32.mrf.mxu0
    %v826 = vadd.f32 %v728, %v825
    %827 = vmatprep.mubr.f32.mxu0 0.0
    %828 = vmatmul.mubr.f32.gmra.mxu0 %v749
    %v829 = vpop.f32.mrf.mxu0
    %v830 = vadd.f32 %v733, %v829
    %v831 = vpop.f32.mrf.mxu0
    %v832 = vadd.f32 %v733, %v831
    %833 = vmatprep.mubr.f32.mxu0 0.0
    %834 = vmatmul.mubr.f32.gmra.mxu0 %v752
    %v835 = vpop.f32.mrf.mxu0
    %v836 = vadd.f32 %v738, %v835
    %v837 = vpop.f32.mrf.mxu0
    %v838 = vadd.f32 %v738, %v837
    %839 = vmatprep.mubr.f32.mxu0 0.0
    %840 = vmatmul.mubr.f32.gmra.mxu0 %v755
    %v841 = vpop.f32.mrf.mxu0
    %v842 = vadd.f32 %v743, %v841
    %v843 = vpop.f32.mrf.mxu0
    %v844 = vadd.f32 %v743, %v843
    %845 = vdwg.mxu0
    %v846 = vmul.f32 %v824, 0.5
    %v847 = vmul.f32 %v826, 0.5
    %v848 = vmul.f32 %v830, 0.5
    %v849 = vmul.f32 %v832, 0.5
    %v850 = vmul.f32 %v836, 0.5
    %v851 = vmul.f32 %v838, 0.5
    %v852 = vmul.f32 %v842, 0.5
    %v853 = vmul.f32 %v844, 0.5
    %v854 = vmul.f32 %v824, 0.70710677
    %v855 = vmul.f32 %v826, 0.70710677
    %v856 = vmul.f32 %v830, 0.70710677
    %v857 = vmul.f32 %v832, 0.70710677
    %v858 = vmul.f32 %v836, 0.70710677
    %v859 = vmul.f32 %v838, 0.70710677
    %v860 = vmul.f32 %v842, 0.70710677
    %v861 = vmul.f32 %v844, 0.70710677
    %v862 = vand.u32 2147483647, %v854
    %v863 = vand.u32 2147483647, %v855
    %v864 = vand.u32 2147483647, %v856
    %v865 = vand.u32 2147483647, %v857
    %v866 = vand.u32 2147483647, %v858
    %v867 = vand.u32 2147483647, %v859
    %v868 = vand.u32 2147483647, %v860
    %v869 = vand.u32 2147483647, %v861
    %v870 = vmul.f32 %v862, 0.3275911
    %v871 = vmul.f32 %v863, 0.3275911
    %v872 = vmul.f32 %v864, 0.3275911
    %v873 = vmul.f32 %v865, 0.3275911
    %v874 = vmul.f32 %v866, 0.3275911
    %v875 = vmul.f32 %v867, 0.3275911
    %v876 = vmul.f32 %v868, 0.3275911
    %v877 = vmul.f32 %v869, 0.3275911
    %v878 = vadd.f32 %v870, 1.0
    %v879 = vadd.f32 %v871, 1.0
    %v880 = vadd.f32 %v872, 1.0
    %v881 = vadd.f32 %v873, 1.0
    %v882 = vadd.f32 %v874, 1.0
    %v883 = vadd.f32 %v875, 1.0
    %v884 = vadd.f32 %v876, 1.0
    %v885 = vadd.f32 %v877, 1.0
    %v886 = vrcp.pop %v878
    %v887 = vrcp.pop %v879
    %v888 = vrcp.pop %v880
    %v889 = vrcp.pop %v881
    %v890 = vrcp.pop %v882
    %v891 = vrcp.pop %v883
    %v892 = vrcp.pop %v884
    %v893 = vrcp.pop %v885
    %v894 = vmul.f32 %v886, 1.0614054
    %v895 = vmul.f32 %v887, 1.0614054
    %v896 = vmul.f32 %v888, 1.0614054
    %v897 = vmul.f32 %v889, 1.0614054
    %v898 = vmul.f32 %v890, 1.0614054
    %v899 = vmul.f32 %v891, 1.0614054
    %v900 = vmul.f32 %v892, 1.0614054
    %v901 = vmul.f32 %v893, 1.0614054
    %v902 = vsub.f32 %v894, 1.4531521
    %v903 = vsub.f32 %v895, 1.4531521
    %v904 = vsub.f32 %v896, 1.4531521
    %v905 = vsub.f32 %v897, 1.4531521
    %v906 = vsub.f32 %v898, 1.4531521
    %v907 = vsub.f32 %v899, 1.4531521
    %v908 = vsub.f32 %v900, 1.4531521
    %v909 = vsub.f32 %v901, 1.4531521
    %v910 = vmul.f32 %v902, %v886
    %v911 = vmul.f32 %v903, %v887
    %v912 = vmul.f32 %v904, %v888
    %v913 = vmul.f32 %v905, %v889
    %v914 = vmul.f32 %v906, %v890
    %v915 = vmul.f32 %v907, %v891
    %v916 = vmul.f32 %v908, %v892
    %v917 = vmul.f32 %v909, %v893
    %v918 = vadd.f32 %v910, 1.4214138
    %v919 = vadd.f32 %v911, 1.4214138
    %v920 = vadd.f32 %v912, 1.4214138
    %v921 = vadd.f32 %v913, 1.4214138
    %v922 = vadd.f32 %v914, 1.4214138
    %v923 = vadd.f32 %v915, 1.4214138
    %v924 = vadd.f32 %v916, 1.4214138
    %v925 = vadd.f32 %v917, 1.4214138
    %v926 = vmul.f32 %v918, %v886
    %v927 = vmul.f32 %v919, %v887
    %v928 = vmul.f32 %v920, %v888
    %v929 = vmul.f32 %v921, %v889
    %v930 = vmul.f32 %v922, %v890
    %v931 = vmul.f32 %v923, %v891
    %v932 = vmul.f32 %v924, %v892
    %v933 = vmul.f32 %v925, %v893
    %v934 = vsub.f32 %v926, 0.28449672
    %v935 = vsub.f32 %v927, 0.28449672
    %v936 = vsub.f32 %v928, 0.28449672
    %v937 = vsub.f32 %v929, 0.28449672
    %v938 = vsub.f32 %v930, 0.28449672
    %v939 = vsub.f32 %v931, 0.28449672
    %v940 = vsub.f32 %v932, 0.28449672
    %v941 = vsub.f32 %v933, 0.28449672
    %v942 = vmul.f32 %v934, %v886
    %v943 = vmul.f32 %v935, %v887
    %v944 = vmul.f32 %v936, %v888
    %v945 = vmul.f32 %v937, %v889
    %v946 = vmul.f32 %v938, %v890
    %v947 = vmul.f32 %v939, %v891
    %v948 = vmul.f32 %v940, %v892
    %v949 = vmul.f32 %v941, %v893
    %v950 = vadd.f32 %v942, 0.2548296
    %v951 = vadd.f32 %v943, 0.2548296
    %v952 = vadd.f32 %v944, 0.2548296
    %v953 = vadd.f32 %v945, 0.2548296
    %v954 = vadd.f32 %v946, 0.2548296
    %v955 = vadd.f32 %v947, 0.2548296
    %v956 = vadd.f32 %v948, 0.2548296
    %v957 = vadd.f32 %v949, 0.2548296
    %v958 = vmul.f32 %v950, %v886
    %v959 = vmul.f32 %v951, %v887
    %v960 = vmul.f32 %v952, %v888
    %v961 = vmul.f32 %v953, %v889
    %v962 = vmul.f32 %v954, %v890
    %v963 = vmul.f32 %v955, %v891
    %v964 = vmul.f32 %v956, %v892
    %v965 = vmul.f32 %v957, %v893
    %v966 = vmul.f32 %v854, %v854
    %v967 = vmul.f32 %v855, %v855
    %v968 = vmul.f32 %v856, %v856
    %v969 = vmul.f32 %v857, %v857
    %v970 = vmul.f32 %v858, %v858
    %v971 = vmul.f32 %v859, %v859
    %v972 = vmul.f32 %v860, %v860
    %v973 = vmul.f32 %v861, %v861
    %v974 = vsub.f32 0.0, %v966
    %v975 = vsub.f32 0.0, %v967
    %v976 = vsub.f32 0.0, %v968
    %v977 = vsub.f32 0.0, %v969
    %v978 = vsub.f32 0.0, %v970
    %v979 = vsub.f32 0.0, %v971
    %v980 = vsub.f32 0.0, %v972
    %v981 = vsub.f32 0.0, %v973
    %v982 = vmul.f32 %v974, 1.442695
    %v983 = vpow.pop %v982
    %v984 = vmul.f32 %v975, 1.442695
    %v985 = vpow.pop %v984
    %v986 = vmul.f32 %v976, 1.442695
    %v987 = vpow.pop %v986
    %v988 = vmul.f32 %v977, 1.442695
    %v989 = vpow.pop %v988
    %v990 = vmul.f32 %v978, 1.442695
    %v991 = vpow.pop %v990
    %v992 = vmul.f32 %v979, 1.442695
    %v993 = vpow.pop %v992
    %v994 = vmul.f32 %v980, 1.442695
    %v995 = vpow.pop %v994
    %v996 = vmul.f32 %v981, 1.442695
    %v997 = vpow.pop %v996
    %v998 = vmul.f32 %v958, %v983
    %v999 = vmul.f32 %v959, %v985
    %v1000 = vmul.f32 %v960, %v987
    %v1001 = vmul.f32 %v961, %v989
    %v1002 = vmul.f32 %v962, %v991
    %v1003 = vmul.f32 %v963, %v993
    %v1004 = vmul.f32 %v964, %v995
    %v1005 = vmul.f32 %v965, %v997
    %v1006 = vsub.f32 1.0, %v998
    %v1007 = vsub.f32 1.0, %v999
    %v1008 = vsub.f32 1.0, %v1000
    %v1009 = vsub.f32 1.0, %v1001
    %v1010 = vsub.f32 1.0, %v1002
    %v1011 = vsub.f32 1.0, %v1003
    %v1012 = vsub.f32 1.0, %v1004
    %v1013 = vsub.f32 1.0, %v1005
    %vm1014 = vcmp.ge.f32.partialorder %v854, 0.0
    %vm1015 = vcmp.ge.f32.partialorder %v855, 0.0
    %vm1016 = vcmp.ge.f32.partialorder %v856, 0.0
    %vm1017 = vcmp.ge.f32.partialorder %v857, 0.0
    %vm1018 = vcmp.ge.f32.partialorder %v858, 0.0
    %vm1019 = vcmp.ge.f32.partialorder %v859, 0.0
    %vm1020 = vcmp.ge.f32.partialorder %v860, 0.0
    %vm1021 = vcmp.ge.f32.partialorder %v861, 0.0
    %v1022 = vsub.f32 0.0, %v1006
    %v1023 = vsub.f32 0.0, %v1007
    %v1024 = vsub.f32 0.0, %v1008
    %v1025 = vsub.f32 0.0, %v1009
    %v1026 = vsub.f32 0.0, %v1010
    %v1027 = vsub.f32 0.0, %v1011
    %v1028 = vsub.f32 0.0, %v1012
    %v1029 = vsub.f32 0.0, %v1013
    %v1030 = vsel %vm1014, %v1006, %v1022
    %v1031 = vsel %vm1015, %v1007, %v1023
    %v1032 = vsel %vm1016, %v1008, %v1024
    %v1033 = vsel %vm1017, %v1009, %v1025
    %v1034 = vsel %vm1018, %v1010, %v1026
    %v1035 = vsel %vm1019, %v1011, %v1027
    %v1036 = vsel %vm1020, %v1012, %v1028
    %v1037 = vsel %vm1021, %v1013, %v1029
    %v1038 = vadd.f32 %v1030, 1.0
    %v1039 = vadd.f32 %v1031, 1.0
    %v1040 = vadd.f32 %v1032, 1.0
    %v1041 = vadd.f32 %v1033, 1.0
    %v1042 = vadd.f32 %v1034, 1.0
    %v1043 = vadd.f32 %v1035, 1.0
    %v1044 = vadd.f32 %v1036, 1.0
    %v1045 = vadd.f32 %v1037, 1.0
    %v1046 = vmul.f32 %v846, %v1038
    %v1047 = vmul.f32 %v847, %v1039
    %v1048 = vmul.f32 %v848, %v1040
    %v1049 = vmul.f32 %v849, %v1041
    %v1050 = vmul.f32 %v850, %v1042
    %v1051 = vmul.f32 %v851, %v1043
    %v1052 = vmul.f32 %v852, %v1044
    %v1053 = vmul.f32 %v853, %v1045
    %v1054 = vld [vmem:[%s7] sm:$0xf]
    %v1055 = vld [vmem:[%s8] sm:$0xf]
    %1057 = vset.pattern.permute.xlu0 0
    %1058 = vperm.xlu0 %1057, %v1055
    %v1059 = vpop.permute.xlu0 %1058
    %v1062 = vsel %vm407, %v1054, 0
    %1064 = vmatprep.subr.mxu0 0.0
    %1065 = vmatpush1.msra.mxu0 0.0
    %1066 = vmatprep.subr.mxu0 0.0
    %1067 = vmatpush1.msra.mxu0 0.0
    %1068 = vmatprep.subr.mxu0 0.0
    %1069 = vmatpush1.msra.mxu0 0.0
    %1070 = vmatprep.subr.mxu0 0.0
    %1071 = vmatpush1.msra.mxu0 0.0
    %1072 = vmatprep.subr.mxu0 0.0
    %1073 = vmatpush1.msra.mxu0 0.0
    %1074 = vmatprep.subr.mxu0 0.0
    %1075 = vmatpush1.msra.mxu0 0.0
    %1076 = vmatprep.subr.mxu0 0.0
    %1077 = vmatpush1.msra.mxu0 0.0
    %1078 = vmatprep.subr.mxu0 0.0
    %1079 = vmatpush1.msra.mxu0 0.0
    %1080 = vmatprep.subr.mxu0 0.0
    %1081 = vmatpush1.msra.mxu0 0.0
    %1082 = vmatprep.subr.mxu0 0.0
    %1083 = vmatpush1.msra.mxu0 0.0
    %1084 = vmatprep.subr.mxu0 0.0
    %1085 = vmatpush1.msra.mxu0 0.0
    %1086 = vmatprep.subr.mxu0 0.0
    %1087 = vmatpush1.msra.mxu0 0.0
    %1088 = vmatprep.subr.mxu0 %v1053
    %1089 = vmatpush1.msra.mxu0 %v1052
    %1090 = vmatprep.subr.mxu0 %v1051
    %1091 = vmatpush1.msra.mxu0 %v1050
    %1092 = vmatprep.subr.mxu0 %v1049
    %1093 = vmatpush1.msra.mxu0 %v1048
    %1094 = vmatprep.subr.mxu0 %v1047
    %1095 = vmatpush1.msra.mxu0 %v1046
    %1096 = vmatprep.subr.mxu0 0.0
    %1097 = vmatpush2.msra.mxu0 0.0
    %1098 = vmatprep.subr.mxu0 0.0
    %1099 = vmatpush2.msra.mxu0 0.0
    %1100 = vmatprep.subr.mxu0 0.0
    %1101 = vmatpush2.msra.mxu0 0.0
    %1102 = vmatprep.subr.mxu0 0.0
    %1103 = vmatpush2.msra.mxu0 0.0
    %1104 = vmatprep.subr.mxu0 0.0
    %1105 = vmatpush2.msra.mxu0 0.0
    %1106 = vmatprep.subr.mxu0 0.0
    %1107 = vmatpush2.msra.mxu0 0.0
    %1108 = vmatprep.subr.mxu0 0.0
    %1109 = vmatpush2.msra.mxu0 0.0
    %1110 = vmatprep.subr.mxu0 0.0
    %1111 = vmatpush2.msra.mxu0 0.0
    %1112 = vmatprep.subr.mxu0 0.0
    %1113 = vmatpush2.msra.mxu0 0.0
    %1114 = vmatprep.subr.mxu0 0.0
    %1115 = vmatpush2.msra.mxu0 0.0
    %1116 = vmatprep.subr.mxu0 0.0
    %1117 = vmatpush2.msra.mxu0 0.0
    %1118 = vmatprep.subr.mxu0 0.0
    %1119 = vmatpush2.msra.mxu0 0.0
    %1120 = vmatprep.subr.mxu0 0.0
    %1121 = vmatpush2.msra.mxu0 0.0
    %1122 = vmatprep.subr.mxu0 0.0
    %1123 = vmatpush2.msra.mxu0 0.0
    %1124 = vmatprep.subr.mxu0 0.0
    %1125 = vmatpush2.msra.mxu0 0.0
    %1126 = vmatprep.subr.mxu0 0.0
    %1127 = vmatpush2.msra.mxu0 0.0
    %1128 = vmatprep.mubr.f32.mxu0 0.0
    %1129 = vmatmul.mubr.f32.gmra.mxu0 %v1062
    %v1130 = vpop.f32.mrf.mxu0
    %v1131 = vadd.f32 %v1059, %v1130
    %v1132 = vpop.f32.mrf.mxu0
    %v1133 = vadd.f32 %v1059, %v1132
    %1134 = vdwg.mxu0
    %v1137 = vcombine.low %v1131, %v1133
    %1139 = vst [vmem:[#allocation2] sm:$0xff] %v1137
    // Predicated region
    $region38: #{tpu_custom_call.1} parent=1 // pred_check
      _
    $region39: #{tpu_custom_call.1} parent=1 // pred_check_branch
      %1141 = sbr.rel (0) target = $region41
    $region40: #{tpu_custom_call.1} parent=1 // pred_region
      %s1143 = ssub.s32 128, 128
      %1144 = vsyncadd [#allocation3], %s1143
      %s1146 = sshll.u32 [#allocation2], 4
      %s1147 = int_to_ptr.vmem [resolvable:$true] %s1146
      %1149 = dma.vmem_to_hbm [thread:$0]  %s1147, 128, %s9, [#allocation3]
    $region41: #{tpu_custom_call.1} parent=1 // pred_fallthru
      _
    // Predicated region
    $region42: #{tpu_custom_call.1} parent=1 // pred_check
      _
    $region43: #{tpu_custom_call.1} parent=1 // pred_check_branch
      %1151 = sbr.rel (0) target = $region45
    $region44: #{tpu_custom_call.1} parent=1 // pred_region
      %1152 = dma.done [#allocation3], 128
    $region45: #{tpu_custom_call.1} parent=1 // pred_fallthru
      _
    %1153 = vsyncpa [#allocation3], 1

</llo_original>
